<compile_context>
chip_gen: v5e
topology: v5e:2x2
jax: 0.10.0
libtpu: 0.0.40
codegen_flags: <defaults>
</compile_context>

<pallas_src>
from functools import partial

import jax
import jax.numpy as jnp
from jax.experimental import pallas as pl
from jax.experimental.pallas import tpu as pltpu


# --------------------------- small shape helpers -----------------------------

def _round_up(x, m):
    return ((x + m - 1) // m) * m


def _pick_tile(dim, preferred, align):
    """Return (tile, padded_dim).

    tile is a multiple of `align`; padded_dim is a multiple of tile and >= dim.
    Small dims use a single full (aligned) block; large dims prefer `preferred`
    (or a near-preferred divisor that avoids padding entirely).
    """
    preferred = max(align, (preferred // align) * align)
    if dim <= preferred:
        t = _round_up(dim, align)
        return t, t
    if dim % preferred == 0:
        return preferred, dim
    padded = _round_up(dim, align)
    # look for a divisor of the aligned dim that is close to `preferred`
    for cand in range(preferred, preferred // 2, -align):
        if padded % cand == 0:
            return cand, padded
    return preferred, _round_up(dim, preferred)


_VMEM_LIMIT_CACHE = None


def _vmem_limit_bytes():
    """Generation-aware scoped VMEM budget (v7x-safe fallback)."""
    global _VMEM_LIMIT_CACHE
    if _VMEM_LIMIT_CACHE is None:
        cap = 64 * 1024 * 1024  # conservative default: v7x physical VMEM/core
        try:
            cap = int(pltpu.get_tpu_info().vmem_capacity_bytes)
        except Exception:
            pass
        # leave headroom for double-buffering / compiler scratch; cap at 100MiB
        _VMEM_LIMIT_CACHE = max(32 * 1024 * 1024,
                                min(cap - 16 * 1024 * 1024, 100 * 1024 * 1024))
    return _VMEM_LIMIT_CACHE


# ------------------------------ tiled linear ---------------------------------
# Full-K panels: each grid step does one (tm, K) x (K, tn) MXU contraction and
# writes the output tile directly -- the weight is read from HBM exactly once.

def _linear_nobias_kernel(x_ref, w_ref, o_ref):
    o_ref[...] = jnp.dot(x_ref[...], w_ref[...],
                         preferred_element_type=jnp.float32).astype(o_ref.dtype)


def _linear_bias_kernel(x_ref, w_ref, b_ref, o_ref):
    acc = jnp.dot(x_ref[...], w_ref[...], preferred_element_type=jnp.float32)
    o_ref[...] = (acc + b_ref[...].astype(jnp.float32)).astype(o_ref.dtype)


def linear(x2d, w, b=None, *, tm=512, tn=512):
    """y = x2d @ w (+ b)   (x2d: [M, K], w: [K, Nout], b: [Nout] or None)."""
    M, K = x2d.shape
    Nout = w.shape[1]

    tm, m_pad = _pick_tile(M, tm, 8)
    tn, n_pad = _pick_tile(Nout, tn, 128)
    if m_pad != M:
        x2d = jnp.pad(x2d, ((0, m_pad - M), (0, 0)))
    if n_pad != Nout:
        w = jnp.pad(w, ((0, 0), (0, n_pad - Nout)))
        if b is not None:
            b = jnp.pad(b, (0, n_pad - Nout))

    grid = (m_pad // tm, n_pad // tn)
    in_specs = [
        pl.BlockSpec((tm, K), lambda i, j: (i, 0)),   # full-K x panel
        pl.BlockSpec((K, tn), lambda i, j: (0, j)),   # full-K weight panel
    ]
    args = [x2d, w]
    kernel = _linear_nobias_kernel
    if b is not None:
        in_specs.append(pl.BlockSpec((1, tn), lambda i, j: (0, j)))
        args.append(b.reshape(1, n_pad))
        kernel = _linear_bias_kernel

    out = pl.pallas_call(
        kernel,
        out_shape=jax.ShapeDtypeStruct((m_pad, n_pad), x2d.dtype),
        grid_spec=pltpu.PrefetchScalarGridSpec(
            num_scalar_prefetch=0,
            grid=grid,
            in_specs=in_specs,
            out_specs=pl.BlockSpec((tm, tn), lambda i, j: (i, j)),
        ),
        compiler_params=pltpu.CompilerParams(
            dimension_semantics=("parallel", "parallel"),
            vmem_limit_bytes=_vmem_limit_bytes(),
        ),
    )(*args)

    if (m_pad, n_pad) != (M, Nout):
        out = out[:M, :Nout]
    return out


# ------------------------ flash attention over heads -------------------------

def _flash_attn_kernel(q_ref, k_ref, v_ref, o_ref, m_ref, l_ref, acc_ref,
                       *, num_heads, head_dim, scale, kv_len):
    # q_ref/o_ref: (1, tq, C), k_ref/v_ref: (1, tkv, C) with C = num_heads*D.
    # Scratch: m_ref (tq, H) f32 running max; l_ref/acc_ref (tq, C) f32
    # head-broadcast denominator / numerator (lane-dense).
    ki = pl.program_id(2)

    @pl.when(ki == 0)
    def _init():
        m_ref[...] = jnp.full_like(m_ref, -jnp.inf)
        l_ref[...] = jnp.zeros_like(l_ref)
        acc_ref[...] = jnp.zeros_like(acc_ref)

    # Lane-dense tile loads; pre-scale q once per grid step (q *= scale).
    q_all = (q_ref[0] * scale).astype(q_ref.dtype)   # (tq, C), native dtype
    k_all = k_ref[0]                                  # (tkv, C)
    v_all = v_ref[0]                                  # (tkv, C)

    tq = q_all.shape[0]
    tkv = k_all.shape[0]

    if kv_len is not None:
        # KV padding present: mask padded key columns with a huge negative.
        kv_ids = ki * tkv + jax.lax.broadcasted_iota(jnp.int32, (tq, tkv), 1)
        kv_mask = kv_ids < kv_len

    for h in range(num_heads):
        sl = slice(h * head_dim, (h + 1) * head_dim)
        q = q_all[:, sl]                       # (tq, D)
        k = k_all[:, sl]                       # (tkv, D)
        v = v_all[:, sl]                       # (tkv, D)

        # QK^T via dot_general contracting the last dims (no explicit .T).
        s = jax.lax.dot_general(q, k, (((1,), (1,)), ((), ())),
                                preferred_element_type=jnp.float32)  # (tq, tkv)
        if kv_len is not None:
            s = jnp.where(kv_mask, s, jnp.float32(-1e30))

        m_prev = m_ref[:, h:h + 1]                                    # (tq, 1)
        m_new = jnp.maximum(m_prev, jnp.max(s, axis=-1, keepdims=True))
        alpha = jnp.exp(m_prev - m_new)                               # (tq, 1)
        # NOTE: on v6e/v7x the exp can be done in bf16 for 2x EUP throughput;
        # kept f32 here so the same kernel is exact on v5e as well.
        p = jnp.exp(s - m_new)                                        # (tq, tkv)

        p_sum = jnp.sum(p, axis=-1, keepdims=True)                    # (tq, 1)
        pv = jnp.dot(p.astype(v.dtype), v,
                     preferred_element_type=jnp.float32)              # (tq, D)

        l_ref[:, sl] = alpha * l_ref[:, sl] + p_sum    # head-broadcast denom
        acc_ref[:, sl] = alpha * acc_ref[:, sl] + pv
        m_ref[:, h:h + 1] = m_new

    @pl.when(ki == pl.num_programs(2) - 1)
    def _finalize():
        # Exact divide (once per q tile) + single lane-dense (tq, C) store.
        o_ref[0] = (acc_ref[...] / l_ref[...]).astype(o_ref.dtype)


def attention(qkv3, num_heads, scale, *, tq=256, tkv=128):
    """qkv3: [B, N, 3C] (qkv Linear output) -> [B, N, C] attention output.

    The 3C axis is laid out (3, H, D) exactly as the PyTorch reshape implies,
    so the q/k/v planes are addressed purely through BlockSpec index_maps
    (no wrapper transposes / HBM round-trips).  Requires C % 128 == 0.
    """
    B, N, C3 = qkv3.shape
    C = C3 // 3
    D = C // num_heads

    # Tile / padding plan: tkv divides tq divides n_pad.
    if N <= tq:
        tq = tkv = n_pad = _round_up(N, 8)
    else:
        tkv = min(tkv, tq)
        assert tq % tkv == 0
        n_pad = _round_up(N, tq)
    kv_len = N if n_pad != N else None           # static; enables masking
    if n_pad != N:
        qkv3 = jnp.pad(qkv3, ((0, 0), (0, n_pad - N), (0, 0)))

    grid = (B, n_pad // tq, n_pad // tkv)        # KV (reduction) axis last

    q_spec = pl.BlockSpec((1, tq, C), lambda b, qi, ki: (b, qi, 0))
    k_spec = pl.BlockSpec((1, tkv, C), lambda b, qi, ki: (b, ki, 1))
    v_spec = pl.BlockSpec((1, tkv, C), lambda b, qi, ki: (b, ki, 2))
    o_spec = pl.BlockSpec((1, tq, C), lambda b, qi, ki: (b, qi, 0))

    kern = partial(_flash_attn_kernel, num_heads=num_heads, head_dim=D,
                   scale=scale, kv_len=kv_len)

    out = pl.pallas_call(
        kern,
        out_shape=jax.ShapeDtypeStruct((B, n_pad, C), qkv3.dtype),
        grid_spec=pltpu.PrefetchScalarGridSpec(
            num_scalar_prefetch=0,
            grid=grid,
            in_specs=[q_spec, k_spec, v_spec],
            out_specs=o_spec,
            scratch_shapes=[
                pltpu.VMEM((tq, num_heads), jnp.float32),  # running max m
                pltpu.VMEM((tq, C), jnp.float32),          # head-bcast denom l
                pltpu.VMEM((tq, C), jnp.float32),          # lane-dense acc
            ],
        ),
        compiler_params=pltpu.CompilerParams(
            dimension_semantics=("parallel", "parallel", "arbitrary"),
            vmem_limit_bytes=_vmem_limit_bytes(),
        ),
    )(qkv3, qkv3, qkv3)

    if n_pad != N:
        out = out[:, :N, :]
    return out


# ------------------------------ module wrapper --------------------------------

def init_rpe_attention_params(key, dim, num_heads, qkv_bias=False):
    k1, k2, k3, k4 = jax.random.split(key, 4)
    std = 0.02
    params = {
        # Stored as (in, out), i.e. already transposed w.r.t. nn.Linear.weight.
        "w_qkv": jax.random.normal(k1, (dim, 3 * dim), jnp.float32) * std,
        # qkv_bias=False (module default): no bias term at all.
        "b_qkv": (jax.random.normal(k3, (3 * dim,), jnp.float32) * std
                  if qkv_bias else None),
        "w_proj": jax.random.normal(k2, (dim, dim), jnp.float32) * std,
        "b_proj": jax.random.normal(k4, (dim,), jnp.float32) * std,
    }
    return params


def rpe_attention_forward(x, params, num_heads):
    """Forward pass of RPEAttention with rpe_config=None (plain MHA)."""
    B, N, C = x.shape
    head_dim = C // num_heads
    scale = head_dim ** (-0.5)

    # qkv projection (full-K tiled Pallas matmul; bias skipped when qkv_bias=False)
    qkv2d = linear(x.reshape(B * N, C), params["w_qkv"], params["b_qkv"])
    qkv3 = qkv2d.reshape(B, N, 3 * C)        # free reshape, no transpose

    # flash attention (Pallas kernel: tiled QK^T, online softmax, @V)
    out = attention(qkv3, num_heads, scale)  # (B, N, C), head-merged layout

    # output projection (full-K tiled Pallas matmul)
    out2d = linear(out.reshape(B * N, C), params["w_proj"], params["b_proj"])
    return out2d.reshape(B, N, C)


# ------------------------------ reference (JAX) --------------------------------

def rpe_attention_reference(x, params, num_heads):
    B, N, C = x.shape
    head_dim = C // num_heads
    scale = head_dim ** (-0.5)
    qkv = x @ params["w_qkv"]
    if params["b_qkv"] is not None:
        qkv = qkv + params["b_qkv"]
    qkv = qkv.reshape(B, N, 3, num_heads, head_dim).transpose(2, 0, 3, 1, 4)
    q, k, v = qkv[0], qkv[1], qkv[2]
    q = q * scale
    attn = jnp.einsum("bhqd,bhkd->bhqk", q, k)
    attn = jax.nn.softmax(attn, axis=-1)
    out = jnp.einsum("bhqk,bhkd->bhqd", attn, v)
    out = out.transpose(0, 2, 1, 3).reshape(B, N, C)
    return out @ params["w_proj"] + params["b_proj"]


# ----------------------------------- main --------------------------------------

if __name__ == "__main__":
    key = jax.random.PRNGKey(0)
    kx1, kx2, kp = jax.random.split(key, 3)

    # Case 1: divisible shapes; C is a multiple of 128 so the attention tiles
    # are lane-dense ([B, N, H*D] layout).
    B, N, C, H = 2, 16, 128, 4
    x1 = jax.random.normal(kx1, (B, N, C), jnp.float32)
    params = init_rpe_attention_params(kp, C, H)

    y1 = jax.block_until_ready(rpe_attention_forward(x1, params, H))
    y1_ref = rpe_attention_reference(x1, params, H)
    assert y1.shape == (B, N, C)
    assert jnp.allclose(y1, y1_ref, atol=2e-3, rtol=2e-3), "case1 mismatch"

    # Case 2: non-divisible token count (exercises M/N padding + KV masking).
    B2, N2 = 1, 20
    x2 = jax.random.normal(kx2, (B2, N2, C), jnp.float32)
    y2 = jax.block_until_ready(rpe_attention_forward(x2, params, H))
    y2_ref = rpe_attention_reference(x2, params, H)
    assert y2.shape == (B2, N2, C)
    assert jnp.allclose(y2, y2_ref, atol=2e-3, rtol=2e-3), "case2 mismatch"

    # Case 3: bf16 end-to-end (native-dtype MXU operands; f32 softmax state).
    params_bf16 = jax.tree_util.tree_map(
        lambda p: p.astype(jnp.bfloat16), params)
    y3 = jax.block_until_ready(
        rpe_attention_forward(x1.astype(jnp.bfloat16), params_bf16, H))
    assert y3.shape == (B, N, C) and y3.dtype == jnp.bfloat16
    assert float(jnp.max(jnp.abs(y3.astype(jnp.float32) - y1_ref))) < 1e-1, \
        "bf16 sanity check failed"

    print("KERNEL_OK")
</pallas_src>

<mosaic_0001>
module attributes {stable_mosaic.version = 11 : i64} {
  func.func @_linear_nobias_kernel(%arg0: i32, %arg1: i32, %arg2: memref<32x128xf32, #tpu.memory_space<vmem>>, %arg3: memref<128x384xf32, #tpu.memory_space<vmem>>, %arg4: memref<32x384xf32, #tpu.memory_space<vmem>>) attributes {dimension_semantics = [#tpu.dimension_semantics<parallel>, #tpu.dimension_semantics<parallel>], iteration_bounds = array<i64: 1, 1>, scalar_prefetch = 0 : i64, scratch_operands = 0 : i64, tpu.core_type = #tpu.core_type<tc>, window_params = [{transform_indices = @transform_0, window_bounds = array<i64: 32, 128>}, {transform_indices = @transform_1, window_bounds = array<i64: 128, 384>}, {transform_indices = @transform_2, window_bounds = array<i64: 32, 384>}]} {
    %c0 = arith.constant 0 : index
    %c0_0 = arith.constant 0 : index
    %0 = vector.load %arg2[%c0, %c0_0] : memref<32x128xf32, #tpu.memory_space<vmem>>, vector<32x128xf32>
    %c0_1 = arith.constant 0 : index
    %c0_2 = arith.constant 0 : index
    %1 = vector.load %arg3[%c0_1, %c0_2] : memref<128x384xf32, #tpu.memory_space<vmem>>, vector<128x384xf32>
    %cst = arith.constant dense<0.000000e+00> : vector<32x384xf32>
    %2 = tpu.matmul %0, %1, %cst {dimension_numbers = #tpu.dot_dimension_numbers<[1], [0], [0], [1], [0, 0, 1, 1], [], []>} : vector<32x128xf32>, vector<128x384xf32>, vector<32x384xf32> -> vector<32x384xf32>
    %c0_3 = arith.constant 0 : index
    %c0_4 = arith.constant 0 : index
    %3 = vector.load %arg4[%c0_3, %c0_4] : memref<32x384xf32, #tpu.memory_space<vmem>>, vector<32x384xf32>
    tpu.vector_store %arg4[%c0_3, %c0_4], %2 {strides = array<i32>} : memref<32x384xf32, #tpu.memory_space<vmem>>, vector<32x384xf32>,
    return
  }
  func.func @transform_0(%arg0: i32, %arg1: i32) -> (i32, i32) {
    %c0_i32 = arith.constant 0 : i32
    %c0_i32_0 = arith.constant 0 : i32
    return %arg0, %c0_i32 : i32, i32
  }
  func.func @transform_1(%arg0: i32, %arg1: i32) -> (i32, i32) {
    %c0_i32 = arith.constant 0 : i32
    %c0_i32_0 = arith.constant 0 : i32
    return %c0_i32, %arg1 : i32, i32
  }
  func.func @transform_2(%arg0: i32, %arg1: i32) -> (i32, i32) {
    %c0_i32 = arith.constant 0 : i32
    return %arg0, %arg1 : i32, i32
  }
}

</mosaic_0001>

<llo_original>
// kernel: tpu_custom_call.1
$region0: #{tpu_custom_call.1}
  #allocation0 [shape = 'u32[]', space=smem, size = 0x4, offset = 0x4, fixed_abs, tag = 'smem constant byte address 0x4 - core index']
  #allocation1 [shape = 'u32[72,128]{1,0:T(1,128)}', space=vmem, size = 0x9000, scoped, tag = 'internal scratch']
  %s0 = inlined_call_operand.hbm [shape: f32[32,128], index: 0, kind: input, shape index: {}]
  %s1 = inlined_call_operand.hbm [shape: f32[128,384], index: 1, kind: input, shape index: {}]
  %s2 = inlined_call_operand.hbm [shape: f32[32,384], index: 2, kind: output, shape index: {}]
  %s3 = sld [smem:[#allocation0]]
  $region26: #{tpu_custom_call.1} parent=0
    _
  %s5 = ssub.s32 1, %s3
  %s6 = scalar_select 0, %s5, %s3
  $region1: #{tpu_custom_call.1} parent=0
    #allocation2 [shape = 'u8[16384]{0}', space=vmem, size = 0x4000, scoped, tag = 'input window, operand 0, single buffered']
    #allocation3 [shape = 's32[1]{0}', space=sflag, size = 0x4, scoped, tag = 'scoped memory for tpu_custom_call.1']
    #allocation4 [shape = 's32[1]{0}', space=sflag, size = 0x4, scoped, tag = 'scoped memory for tpu_custom_call.1']
    #allocation5 [shape = 'u8[196608]{0}', space=vmem, size = 0x30000, scoped, tag = 'input window, operand 1, single buffered']
    #allocation6 [shape = 's32[1]{0}', space=sflag, size = 0x4, scoped, tag = 'scoped memory for tpu_custom_call.1']
    #allocation7 [shape = 'u8[49152]{0}', space=vmem, size = 0xc000, scoped, tag = 'output window, operand 0, single buffered']
    %7 = vsyncpa [#allocation3], 0
    %8 = vsyncpa [#allocation6], 0
    %9 = vsyncpa [#allocation4], 0
    // Predicated region
    $region2: #{tpu_custom_call.1} parent=1 // pred_check
      _
    $region3: #{tpu_custom_call.1} parent=1 // pred_check_branch
      %11 = sbr.rel (0) target = $region5
    $region4: #{tpu_custom_call.1} parent=1 // pred_region
      %13 = vsyncadd [#allocation3], 0
      %s14 = sshll.u32 %s0, 4
      %s15 = int_to_ptr.hbm [resolvable:$true] %s14
      %s16 = sshll.u32 [#allocation2], 4
      %s17 = int_to_ptr.vmem [resolvable:$true] %s16
      %22 = dma.hbm_to_vmem [thread:$0]  %s15, 512, %s17, [#allocation3], 128, 128, 8
    $region5: #{tpu_custom_call.1} parent=1 // pred_fallthru
      _
    // Predicated region
    $region6: #{tpu_custom_call.1} parent=1 // pred_check
      _
    $region7: #{tpu_custom_call.1} parent=1 // pred_check_branch
      %24 = sbr.rel (0) target = $region9
    $region8: #{tpu_custom_call.1} parent=1 // pred_region
      %26 = vsyncadd [#allocation6], 0
      %s27 = sshll.u32 %s1, 4
      %s28 = int_to_ptr.hbm [resolvable:$true] %s27
      %s29 = sshll.u32 [#allocation5], 4
      %s30 = int_to_ptr.vmem [resolvable:$true] %s29
      %35 = dma.hbm_to_vmem [thread:$0]  %s28, 6144, %s30, [#allocation6], 384, 384, 24
    $region9: #{tpu_custom_call.1} parent=1 // pred_fallthru
      _
    // Predicated region
    $region10: #{tpu_custom_call.1} parent=1 // pred_check
      _
    $region11: #{tpu_custom_call.1} parent=1 // pred_check_branch
      %37 = sbr.rel (0) target = $region13
    $region12: #{tpu_custom_call.1} parent=1 // pred_region
      %39 = dma.done [#allocation3], 512
    $region13: #{tpu_custom_call.1} parent=1 // pred_fallthru
      _
    // Predicated region
    $region14: #{tpu_custom_call.1} parent=1 // pred_check
      _
    $region15: #{tpu_custom_call.1} parent=1 // pred_check_branch
      %41 = sbr.rel (0) target = $region17
    $region16: #{tpu_custom_call.1} parent=1 // pred_region
      %43 = dma.done [#allocation6], 6144
    $region17: #{tpu_custom_call.1} parent=1 // pred_fallthru
      _
    %v44 = vld [vmem:[#allocation2] sm:$0xff]
    %v45 = vld [vmem:[#allocation2 + $0x8] sm:$0xff]
    %v46 = vld [vmem:[#allocation2 + $0x10] sm:$0xff]
    %v47 = vld [vmem:[#allocation2 + $0x18] sm:$0xff]
    %v48 = vld [vmem:[#allocation5] sm:$0xff]
    %v49 = vld [vmem:[#allocation5 + $0x8] sm:$0xff]
    %v50 = vld [vmem:[#allocation5 + $0x10] sm:$0xff]
    %v51 = vld [vmem:[#allocation5 + $0x18] sm:$0xff]
    %v52 = vld [vmem:[#allocation5 + $0x20] sm:$0xff]
    %v53 = vld [vmem:[#allocation5 + $0x28] sm:$0xff]
    %v54 = vld [vmem:[#allocation5 + $0x30] sm:$0xff]
    %v55 = vld [vmem:[#allocation5 + $0x38] sm:$0xff]
    %v56 = vld [vmem:[#allocation5 + $0x40] sm:$0xff]
    %v57 = vld [vmem:[#allocation5 + $0x48] sm:$0xff]
    %v58 = vld [vmem:[#allocation5 + $0x50] sm:$0xff]
    %v59 = vld [vmem:[#allocation5 + $0x58] sm:$0xff]
    %v60 = vld [vmem:[#allocation5 + $0x60] sm:$0xff]
    %v61 = vld [vmem:[#allocation5 + $0x68] sm:$0xff]
    %v62 = vld [vmem:[#allocation5 + $0x70] sm:$0xff]
    %v63 = vld [vmem:[#allocation5 + $0x78] sm:$0xff]
    %v64 = vld [vmem:[#allocation5 + $0x80] sm:$0xff]
    %v65 = vld [vmem:[#allocation5 + $0x88] sm:$0xff]
    %v66 = vld [vmem:[#allocation5 + $0x90] sm:$0xff]
    %v67 = vld [vmem:[#allocation5 + $0x98] sm:$0xff]
    %v68 = vld [vmem:[#allocation5 + $0xa0] sm:$0xff]
    %v69 = vld [vmem:[#allocation5 + $0xa8] sm:$0xff]
    %v70 = vld [vmem:[#allocation5 + $0xb0] sm:$0xff]
    %v71 = vld [vmem:[#allocation5 + $0xb8] sm:$0xff]
    %v72 = vld [vmem:[#allocation5 + $0xc0] sm:$0xff]
    %v73 = vld [vmem:[#allocation5 + $0xc8] sm:$0xff]
    %v74 = vld [vmem:[#allocation5 + $0xd0] sm:$0xff]
    %v75 = vld [vmem:[#allocation5 + $0xd8] sm:$0xff]
    %v76 = vld [vmem:[#allocation5 + $0xe0] sm:$0xff]
    %v77 = vld [vmem:[#allocation5 + $0xe8] sm:$0xff]
    %v78 = vld [vmem:[#allocation5 + $0xf0] sm:$0xff]
    %v79 = vld [vmem:[#allocation5 + $0xf8] sm:$0xff]
    %v80 = vld [vmem:[#allocation5 + $0x100] sm:$0xff]
    %v81 = vld [vmem:[#allocation5 + $0x108] sm:$0xff]
    %v82 = vld [vmem:[#allocation5 + $0x110] sm:$0xff]
    %v83 = vld [vmem:[#allocation5 + $0x118] sm:$0xff]
    %v84 = vld [vmem:[#allocation5 + $0x120] sm:$0xff]
    %v85 = vld [vmem:[#allocation5 + $0x128] sm:$0xff]
    %v86 = vld [vmem:[#allocation5 + $0x130] sm:$0xff]
    %v87 = vld [vmem:[#allocation5 + $0x138] sm:$0xff]
    %v88 = vld [vmem:[#allocation5 + $0x140] sm:$0xff]
    %v89 = vld [vmem:[#allocation5 + $0x148] sm:$0xff]
    %v90 = vld [vmem:[#allocation5 + $0x150] sm:$0xff]
    %v91 = vld [vmem:[#allocation5 + $0x158] sm:$0xff]
    %v92 = vld [vmem:[#allocation5 + $0x160] sm:$0xff]
    %v93 = vld [vmem:[#allocation5 + $0x168] sm:$0xff]
    %v94 = vld [vmem:[#allocation5 + $0x170] sm:$0xff]
    %v95 = vld [vmem:[#allocation5 + $0x178] sm:$0xff]
    %96 = vmatpush.msra.mxu0 %v93
    %97 = vmatpush.msra.mxu0 %v90
    %98 = vmatpush.msra.mxu0 %v87
    %99 = vmatpush.msra.mxu0 %v84
    %100 = vmatpush.msra.mxu0 %v81
    %101 = vmatpush.msra.mxu0 %v78
    %102 = vmatpush.msra.mxu0 %v75
    %103 = vmatpush.msra.mxu0 %v72
    %104 = vmatpush.msra.mxu0 %v69
    %105 = vmatpush.msra.mxu0 %v66
    %106 = vmatpush.msra.mxu0 %v63
    %107 = vmatpush.msra.mxu0 %v60
    %108 = vmatpush.msra.mxu0 %v57
    %109 = vmatpush.msra.mxu0 %v54
    %110 = vmatpush.msra.mxu0 %v51
    %111 = vmatpush.msra.mxu0 %v48
    %112 = vmatmul.f32.gmra.mxu0 %v44
    %v113 = vpop.f32.mrf.mxu0
    %v114 = vadd.f32 0.0, %v113
    %115 = vmatmul.f32.gmra.mxu0 %v45
    %v116 = vpop.f32.mrf.mxu0
    %v117 = vadd.f32 0.0, %v116
    %118 = vmatmul.f32.gmra.mxu0 %v46
    %v119 = vpop.f32.mrf.mxu0
    %v120 = vadd.f32 0.0, %v119
    %121 = vmatmul.f32.gmra.mxu0 %v47
    %v122 = vpop.f32.mrf.mxu0
    %v123 = vadd.f32 0.0, %v122
    %124 = vdwg.mxu0
    %125 = vmatpush.msra.mxu0 %v94
    %126 = vmatpush.msra.mxu0 %v91
    %127 = vmatpush.msra.mxu0 %v88
    %128 = vmatpush.msra.mxu0 %v85
    %129 = vmatpush.msra.mxu0 %v82
    %130 = vmatpush.msra.mxu0 %v79
    %131 = vmatpush.msra.mxu0 %v76
    %132 = vmatpush.msra.mxu0 %v73
    %133 = vmatpush.msra.mxu0 %v70
    %134 = vmatpush.msra.mxu0 %v67
    %135 = vmatpush.msra.mxu0 %v64
    %136 = vmatpush.msra.mxu0 %v61
    %137 = vmatpush.msra.mxu0 %v58
    %138 = vmatpush.msra.mxu0 %v55
    %139 = vmatpush.msra.mxu0 %v52
    %140 = vmatpush.msra.mxu0 %v49
    %141 = vmatmul.f32.gmra.mxu0 %v44
    %v142 = vpop.f32.mrf.mxu0
    %v143 = vadd.f32 0.0, %v142
    %144 = vmatmul.f32.gmra.mxu0 %v45
    %v145 = vpop.f32.mrf.mxu0
    %v146 = vadd.f32 0.0, %v145
    %147 = vmatmul.f32.gmra.mxu0 %v46
    %v148 = vpop.f32.mrf.mxu0
    %v149 = vadd.f32 0.0, %v148
    %150 = vmatmul.f32.gmra.mxu0 %v47
    %v151 = vpop.f32.mrf.mxu0
    %v152 = vadd.f32 0.0, %v151
    %153 = vdwg.mxu0
    %154 = vmatpush.msra.mxu0 %v95
    %155 = vmatpush.msra.mxu0 %v92
    %156 = vmatpush.msra.mxu0 %v89
    %157 = vmatpush.msra.mxu0 %v86
    %158 = vmatpush.msra.mxu0 %v83
    %159 = vmatpush.msra.mxu0 %v80
    %160 = vmatpush.msra.mxu0 %v77
    %161 = vmatpush.msra.mxu0 %v74
    %162 = vmatpush.msra.mxu0 %v71
    %163 = vmatpush.msra.mxu0 %v68
    %164 = vmatpush.msra.mxu0 %v65
    %165 = vmatpush.msra.mxu0 %v62
    %166 = vmatpush.msra.mxu0 %v59
    %167 = vmatpush.msra.mxu0 %v56
    %168 = vmatpush.msra.mxu0 %v53
    %169 = vmatpush.msra.mxu0 %v50
    %170 = vmatmul.f32.gmra.mxu0 %v44
    %v171 = vpop.f32.mrf.mxu0
    %v172 = vadd.f32 0.0, %v171
    %173 = vmatmul.f32.gmra.mxu0 %v45
    %v174 = vpop.f32.mrf.mxu0
    %v175 = vadd.f32 0.0, %v174
    %176 = vmatmul.f32.gmra.mxu0 %v46
    %v177 = vpop.f32.mrf.mxu0
    %v178 = vadd.f32 0.0, %v177
    %179 = vmatmul.f32.gmra.mxu0 %v47
    %v180 = vpop.f32.mrf.mxu0
    %v181 = vadd.f32 0.0, %v180
    %182 = vdwg.mxu0
    %183 = vst [vmem:[#allocation7] sm:$0xff] %v114
    %184 = vst [vmem:[#allocation7 + $0x8] sm:$0xff] %v143
    %185 = vst [vmem:[#allocation7 + $0x10] sm:$0xff] %v172
    %186 = vst [vmem:[#allocation7 + $0x18] sm:$0xff] %v117
    %187 = vst [vmem:[#allocation7 + $0x20] sm:$0xff] %v146
    %188 = vst [vmem:[#allocation7 + $0x28] sm:$0xff] %v175
    %189 = vst [vmem:[#allocation7 + $0x30] sm:$0xff] %v120
    %190 = vst [vmem:[#allocation7 + $0x38] sm:$0xff] %v149
    %191 = vst [vmem:[#allocation7 + $0x40] sm:$0xff] %v178
    %192 = vst [vmem:[#allocation7 + $0x48] sm:$0xff] %v123
    %193 = vst [vmem:[#allocation7 + $0x50] sm:$0xff] %v152
    %194 = vst [vmem:[#allocation7 + $0x58] sm:$0xff] %v181
    // Predicated region
    $region18: #{tpu_custom_call.1} parent=1 // pred_check
      _
    $region19: #{tpu_custom_call.1} parent=1 // pred_check_branch
      %196 = sbr.rel (0) target = $region21
    $region20: #{tpu_custom_call.1} parent=1 // pred_region
      %198 = vsyncadd [#allocation4], 0
      %s199 = sshll.u32 [#allocation7], 4
      %s200 = int_to_ptr.vmem [resolvable:$true] %s199
      %s201 = sshll.u32 %s2, 4
      %s202 = int_to_ptr.hbm [resolvable:$true] %s201
      %207 = dma.vmem_to_hbm [thread:$0]  %s200, 1536, %s202, [#allocation4], 384, 384, 24
    $region21: #{tpu_custom_call.1} parent=1 // pred_fallthru
      _
    // Predicated region
    $region22: #{tpu_custom_call.1} parent=1 // pred_check
      _
    $region23: #{tpu_custom_call.1} parent=1 // pred_check_branch
      %209 = sbr.rel (0) target = $region25
    $region24: #{tpu_custom_call.1} parent=1 // pred_region
      %211 = dma.done [#allocation4], 1536
    $region25: #{tpu_custom_call.1} parent=1 // pred_fallthru
      _
    %212 = vsyncpa [#allocation3], 1
    %213 = vsyncpa [#allocation6], 1
    %214 = vsyncpa [#allocation4], 1

</llo_original>
